<compile_context>
chip_gen: v7x
topology: tpu7x:2x2x1
jax: 0.10.0
libtpu: 0.0.40
codegen_flags: <defaults>
</compile_context>

<pallas_src>
from math import pi as PI

import jax
import jax.numpy as jnp
from jax.experimental import pallas as pl
from jax.experimental.pallas import tpu as pltpu

_LANES = 128
_SUBLANES = 8


def make_bessel_basis(num_radial: int, cutoff: float = 5.0,
                      envelope_exponent: int = 5,
                      tile_edges: int = 32768,
                      edge_major: bool = True,
                      out_dtype=jnp.float32):
    """Returns (fn, freq); fn(dist) computes the BesselBasisLayer forward.

    edge_major=True  -> (E, num_radial)  (PyTorch-parity, one XLA transpose)
    edge_major=False -> (num_radial, E)  (no transpose, fast path for fusion)
    out_dtype        -> e.g. jnp.bfloat16 halves output HBM traffic if the
                        consumer tolerates it (default f32 for parity).
    """
    p = envelope_exponent + 1
    a = -(p + 1) * (p + 2) / 2.0
    b = float(p * (p + 2))
    c = -p * (p + 1) / 2.0
    inv_cutoff = 1.0 / cutoff

    # Deterministic parameter init (reset_parameters): freq = arange(1,R+1)*pi.
    # The kernel never reads it from HBM; the radial frequencies are generated
    # in-register by the rotation recurrence below.
    freq = jnp.arange(1, num_radial + 1, dtype=jnp.float32) * PI

    def kernel(dist_ref, out_ref):
        # dist_ref: (tile_rows, 128)              -- one block of edges
        # out_ref : (num_radial, tile_rows, 128)  -- lane-dense per radial row
        x = dist_ref[...] * inv_cutoff
        # 1/x: EUP approximate reciprocal + two Newton steps -> full f32 acc.
        r = pl.reciprocal(x, approx=True)
        r = r * (2.0 - x * r)
        r = r * (2.0 - x * r)
        xp = x ** (p - 1)
        # Horner form of a*x^(p-1) + b*x^p + c*x^(p+1), plus 1/x.
        env = r + xp * (a + x * (b + c * x))
        env = jnp.where(x < 1.0, env, 0.0)        # single vselect mask
        # sin(k*pi*x), k = 1..R: one sin + one cos (half angle) + rotation
        # recurrence -> 2 transcendentals total instead of R.
        h = (0.5 * PI) * x
        sh = jnp.sin(h)
        ch = jnp.cos(h)
        s1 = 2.0 * sh * ch                        # sin(pi*x)
        c1 = 1.0 - 2.0 * sh * sh                  # cos(pi*x), accurate small x
        s, co = s1, c1
        for k in range(num_radial):               # statically unrolled
            out_ref[k] = (env * s).astype(out_ref.dtype)
            if k + 1 < num_radial:
                s, co = s * c1 + co * s1, co * c1 - s * s1

    def fn(dist):
        # dist: (E,) -> (E, num_radial) (or (num_radial, E) if edge_major=False)
        E = dist.shape[0]
        dist = dist.astype(jnp.float32)
        rows_needed = pl.cdiv(E, _LANES)
        max_tile_rows = max(_SUBLANES,
                            (tile_edges // (_LANES * _SUBLANES)) * _SUBLANES)
        # Adapt the tile down for small problems so padding stays minimal.
        eff_tile_rows = min(max_tile_rows,
                            pl.cdiv(rows_needed, _SUBLANES) * _SUBLANES)
        n_blocks = pl.cdiv(rows_needed, eff_tile_rows)
        rows_total = n_blocks * eff_tile_rows
        e_pad = rows_total * _LANES
        if e_pad != E:
            # Pad with cutoff -> x == 1 -> envelope masks to 0; padded columns
            # are sliced off below regardless.
            # TODO(synk): the pad is one extra read+write of dist (~8 B/edge);
            # an SMEM edge-count + in-kernel tail mask would remove it.
            dist = jnp.pad(dist, (0, e_pad - E), constant_values=cutoff)
        dist2d = dist.reshape(rows_total, _LANES)

        cost = pl.CostEstimate(
            flops=(30 + 4 * num_radial) * e_pad,
            transcendentals=3 * e_pad,
            bytes_accessed=4 * e_pad
            + jnp.dtype(out_dtype).itemsize * num_radial * e_pad,
        )

        out3 = pl.pallas_call(
            kernel,
            out_shape=jax.ShapeDtypeStruct((num_radial, rows_total, _LANES),
                                           out_dtype),
            grid_spec=pl.GridSpec(
                grid=(n_blocks,),
                in_specs=[pl.BlockSpec((eff_tile_rows, _LANES),
                                       lambda i: (i, 0))],
                out_specs=pl.BlockSpec((num_radial, eff_tile_rows, _LANES),
                                       lambda i: (0, i, 0)),
            ),
            compiler_params=pltpu.CompilerParams(
                dimension_semantics=("parallel",)),
            cost_estimate=cost,
        )(dist2d)

        if not edge_major:
            # Radial-major fast path: no transpose (edge index is r*128+c).
            return out3.reshape(num_radial, e_pad)[:, :E]
        # PyTorch-parity layout: (E, num_radial). This transpose is a separate
        # XLA op (~64 B/edge extra traffic) kept only for API parity; prefer
        # edge_major=False / fusing into the consumer when possible.
        return out3.transpose(1, 2, 0).reshape(e_pad, num_radial)[:E]

    return fn, freq


def bessel_basis_ref(dist, freq, cutoff, envelope_exponent):
    """Pure-JAX reference mirroring the PyTorch module exactly."""
    p = envelope_exponent + 1
    a = -(p + 1) * (p + 2) / 2.0
    b = p * (p + 2) * 1.0
    c = -p * (p + 1) / 2.0
    x = dist[:, None] / cutoff
    x_p0 = x ** (p - 1)
    x_p1 = x_p0 * x
    x_p2 = x_p1 * x
    env = (1.0 / x + a * x_p0 + b * x_p1 + c * x_p2) * (x < 1.0).astype(x.dtype)
    return env * jnp.sin(freq.reshape(1, -1) * x)


if __name__ == "__main__":
    num_radial = 8
    cutoff = 5.0
    envelope_exponent = 5

    key = jax.random.PRNGKey(0)
    k1, k2 = jax.random.split(key)

    # Case 1: default (large-tile) config, single block, ragged tail.
    E1 = 1000
    dist1 = jax.random.uniform(k1, (E1,), dtype=jnp.float32,
                               minval=0.1, maxval=2.0 * cutoff)
    fn1, freq = make_bessel_basis(num_radial, cutoff, envelope_exponent)
    out1 = jax.block_until_ready(fn1(dist1))
    ref1 = bessel_basis_ref(dist1, freq, cutoff, envelope_exponent)
    assert out1.shape == (E1, num_radial)
    assert jnp.allclose(out1, ref1, atol=1e-5, rtol=1e-5), "case1 mismatch"

    # Case 2: small tile -> multiple grid blocks (exercises the parallel grid
    # axis and padding), plus the no-transpose radial-major fast path.
    E2 = 2500
    dist2 = jax.random.uniform(k2, (E2,), dtype=jnp.float32,
                               minval=0.1, maxval=2.0 * cutoff)
    fn2, _ = make_bessel_basis(num_radial, cutoff, envelope_exponent,
                               tile_edges=1024)
    fn2_rm, _ = make_bessel_basis(num_radial, cutoff, envelope_exponent,
                                  tile_edges=1024, edge_major=False)
    out2 = jax.block_until_ready(fn2(dist2))
    out2_rm = jax.block_until_ready(fn2_rm(dist2))
    ref2 = bessel_basis_ref(dist2, freq, cutoff, envelope_exponent)
    assert out2.shape == (E2, num_radial)
    assert jnp.allclose(out2, ref2, atol=1e-5, rtol=1e-5), "case2 mismatch"
    assert out2_rm.shape == (num_radial, E2)
    assert jnp.allclose(out2_rm, ref2.T, atol=1e-5, rtol=1e-5), "case2 rm mismatch"

    print("KERNEL_OK")
</pallas_src>

<mosaic_0001>
module attributes {stable_mosaic.version = 11 : i64} {
  func.func @kernel(%arg0: i32, %arg1: memref<8x128xf32, #tpu.memory_space<vmem>>, %arg2: memref<8x8x128xf32, #tpu.memory_space<vmem>>) attributes {dimension_semantics = [#tpu.dimension_semantics<parallel>], iteration_bounds = array<i64: 1>, scalar_prefetch = 0 : i64, scratch_operands = 0 : i64, tpu.core_type = #tpu.core_type<tc>, window_params = [{transform_indices = @transform_0, window_bounds = array<i64: 8, 128>}, {transform_indices = @transform_1, window_bounds = array<i64: 8, 8, 128>}]} {
    %c0 = arith.constant 0 : index
    %c0_0 = arith.constant 0 : index
    %0 = vector.load %arg1[%c0, %c0_0] : memref<8x128xf32, #tpu.memory_space<vmem>>, vector<8x128xf32>
    %cst = arith.constant 2.000000e-01 : f32
    %1 = vector.broadcast %cst : f32 to vector<8x128xf32>
    %2 = arith.mulf %0, %1 : vector<8x128xf32>
    %3 = tpu.reciprocal %2 {approx = true} : vector<8x128xf32> -> vector<8x128xf32>
    %4 = arith.mulf %2, %3 : vector<8x128xf32>
    %cst_1 = arith.constant 2.000000e+00 : f32
    %5 = vector.broadcast %cst_1 : f32 to vector<8x128xf32>
    %6 = arith.subf %5, %4 : vector<8x128xf32>
    %7 = arith.mulf %3, %6 : vector<8x128xf32>
    %8 = arith.mulf %2, %7 : vector<8x128xf32>
    %cst_2 = arith.constant 2.000000e+00 : f32
    %9 = vector.broadcast %cst_2 : f32 to vector<8x128xf32>
    %10 = arith.subf %9, %8 : vector<8x128xf32>
    %11 = arith.mulf %7, %10 : vector<8x128xf32>
    %12 = arith.mulf %2, %2 : vector<8x128xf32>
    %13 = arith.mulf %12, %12 : vector<8x128xf32>
    %14 = arith.mulf %2, %13 : vector<8x128xf32>
    %cst_3 = arith.constant -2.100000e+01 : f32
    %15 = vector.broadcast %cst_3 : f32 to vector<8x128xf32>
    %16 = arith.mulf %15, %2 : vector<8x128xf32>
    %cst_4 = arith.constant 4.800000e+01 : f32
    %17 = vector.broadcast %cst_4 : f32 to vector<8x128xf32>
    %18 = arith.addf %17, %16 : vector<8x128xf32>
    %19 = arith.mulf %2, %18 : vector<8x128xf32>
    %cst_5 = arith.constant -2.800000e+01 : f32
    %20 = vector.broadcast %cst_5 : f32 to vector<8x128xf32>
    %21 = arith.addf %20, %19 : vector<8x128xf32>
    %22 = arith.mulf %14, %21 : vector<8x128xf32>
    %23 = arith.addf %11, %22 : vector<8x128xf32>
    %cst_6 = arith.constant 1.000000e+00 : f32
    %24 = vector.broadcast %cst_6 : f32 to vector<8x128xf32>
    %25 = arith.cmpf olt, %2, %24 : vector<8x128xf32>
    %cst_7 = arith.constant 0.000000e+00 : f32
    %26 = vector.broadcast %cst_7 : f32 to vector<8x128xf32>
    %27 = arith.select %25, %23, %26 : vector<8x128xi1>, vector<8x128xf32>
    %cst_8 = arith.constant 1.57079637 : f32
    %28 = vector.broadcast %cst_8 : f32 to vector<8x128xf32>
    %29 = arith.mulf %28, %2 : vector<8x128xf32>
    %30 = math.sin %29 : vector<8x128xf32>
    %31 = math.cos %29 : vector<8x128xf32>
    %cst_9 = arith.constant 2.000000e+00 : f32
    %32 = vector.broadcast %cst_9 : f32 to vector<8x128xf32>
    %33 = arith.mulf %32, %30 : vector<8x128xf32>
    %34 = arith.mulf %33, %31 : vector<8x128xf32>
    %cst_10 = arith.constant 2.000000e+00 : f32
    %35 = vector.broadcast %cst_10 : f32 to vector<8x128xf32>
    %36 = arith.mulf %35, %30 : vector<8x128xf32>
    %37 = arith.mulf %36, %30 : vector<8x128xf32>
    %cst_11 = arith.constant 1.000000e+00 : f32
    %38 = vector.broadcast %cst_11 : f32 to vector<8x128xf32>
    %39 = arith.subf %38, %37 : vector<8x128xf32>
    %40 = arith.mulf %27, %34 : vector<8x128xf32>
    %c0_12 = arith.constant 0 : index
    %c0_13 = arith.constant 0 : index
    %c0_14 = arith.constant 0 : index
    %41 = vector.load %arg2[%c0_12, %c0_13, %c0_14] : memref<8x8x128xf32, #tpu.memory_space<vmem>>, vector<1x8x128xf32>
    %42 = vector.shape_cast %41 : vector<1x8x128xf32> to vector<8x128xf32>
    %43 = vector.shape_cast %40 : vector<8x128xf32> to vector<1x8x128xf32>
    tpu.vector_store %arg2[%c0_12, %c0_13, %c0_14], %43 {strides = array<i32>} : memref<8x8x128xf32, #tpu.memory_space<vmem>>, vector<1x8x128xf32>,
    %44 = arith.mulf %34, %39 : vector<8x128xf32>
    %45 = arith.mulf %39, %34 : vector<8x128xf32>
    %46 = arith.addf %44, %45 : vector<8x128xf32>
    %47 = arith.mulf %39, %39 : vector<8x128xf32>
    %48 = arith.mulf %34, %34 : vector<8x128xf32>
    %49 = arith.subf %47, %48 : vector<8x128xf32>
    %50 = arith.mulf %27, %46 : vector<8x128xf32>
    %c1 = arith.constant 1 : index
    %c0_15 = arith.constant 0 : index
    %c0_16 = arith.constant 0 : index
    %51 = vector.load %arg2[%c1, %c0_15, %c0_16] : memref<8x8x128xf32, #tpu.memory_space<vmem>>, vector<1x8x128xf32>
    %52 = vector.shape_cast %51 : vector<1x8x128xf32> to vector<8x128xf32>
    %53 = vector.shape_cast %50 : vector<8x128xf32> to vector<1x8x128xf32>
    tpu.vector_store %arg2[%c1, %c0_15, %c0_16], %53 {strides = array<i32>} : memref<8x8x128xf32, #tpu.memory_space<vmem>>, vector<1x8x128xf32>,
    %54 = arith.mulf %46, %39 : vector<8x128xf32>
    %55 = arith.mulf %49, %34 : vector<8x128xf32>
    %56 = arith.addf %54, %55 : vector<8x128xf32>
    %57 = arith.mulf %49, %39 : vector<8x128xf32>
    %58 = arith.mulf %46, %34 : vector<8x128xf32>
    %59 = arith.subf %57, %58 : vector<8x128xf32>
    %60 = arith.mulf %27, %56 : vector<8x128xf32>
    %c2 = arith.constant 2 : index
    %c0_17 = arith.constant 0 : index
    %c0_18 = arith.constant 0 : index
    %61 = vector.load %arg2[%c2, %c0_17, %c0_18] : memref<8x8x128xf32, #tpu.memory_space<vmem>>, vector<1x8x128xf32>
    %62 = vector.shape_cast %61 : vector<1x8x128xf32> to vector<8x128xf32>
    %63 = vector.shape_cast %60 : vector<8x128xf32> to vector<1x8x128xf32>
    tpu.vector_store %arg2[%c2, %c0_17, %c0_18], %63 {strides = array<i32>} : memref<8x8x128xf32, #tpu.memory_space<vmem>>, vector<1x8x128xf32>,
    %64 = arith.mulf %56, %39 : vector<8x128xf32>
    %65 = arith.mulf %59, %34 : vector<8x128xf32>
    %66 = arith.addf %64, %65 : vector<8x128xf32>
    %67 = arith.mulf %59, %39 : vector<8x128xf32>
    %68 = arith.mulf %56, %34 : vector<8x128xf32>
    %69 = arith.subf %67, %68 : vector<8x128xf32>
    %70 = arith.mulf %27, %66 : vector<8x128xf32>
    %c3 = arith.constant 3 : index
    %c0_19 = arith.constant 0 : index
    %c0_20 = arith.constant 0 : index
    %71 = vector.load %arg2[%c3, %c0_19, %c0_20] : memref<8x8x128xf32, #tpu.memory_space<vmem>>, vector<1x8x128xf32>
    %72 = vector.shape_cast %71 : vector<1x8x128xf32> to vector<8x128xf32>
    %73 = vector.shape_cast %70 : vector<8x128xf32> to vector<1x8x128xf32>
    tpu.vector_store %arg2[%c3, %c0_19, %c0_20], %73 {strides = array<i32>} : memref<8x8x128xf32, #tpu.memory_space<vmem>>, vector<1x8x128xf32>,
    %74 = arith.mulf %66, %39 : vector<8x128xf32>
    %75 = arith.mulf %69, %34 : vector<8x128xf32>
    %76 = arith.addf %74, %75 : vector<8x128xf32>
    %77 = arith.mulf %69, %39 : vector<8x128xf32>
    %78 = arith.mulf %66, %34 : vector<8x128xf32>
    %79 = arith.subf %77, %78 : vector<8x128xf32>
    %80 = arith.mulf %27, %76 : vector<8x128xf32>
    %c4 = arith.constant 4 : index
    %c0_21 = arith.constant 0 : index
    %c0_22 = arith.constant 0 : index
    %81 = vector.load %arg2[%c4, %c0_21, %c0_22] : memref<8x8x128xf32, #tpu.memory_space<vmem>>, vector<1x8x128xf32>
    %82 = vector.shape_cast %81 : vector<1x8x128xf32> to vector<8x128xf32>
    %83 = vector.shape_cast %80 : vector<8x128xf32> to vector<1x8x128xf32>
    tpu.vector_store %arg2[%c4, %c0_21, %c0_22], %83 {strides = array<i32>} : memref<8x8x128xf32, #tpu.memory_space<vmem>>, vector<1x8x128xf32>,
    %84 = arith.mulf %76, %39 : vector<8x128xf32>
    %85 = arith.mulf %79, %34 : vector<8x128xf32>
    %86 = arith.addf %84, %85 : vector<8x128xf32>
    %87 = arith.mulf %79, %39 : vector<8x128xf32>
    %88 = arith.mulf %76, %34 : vector<8x128xf32>
    %89 = arith.subf %87, %88 : vector<8x128xf32>
    %90 = arith.mulf %27, %86 : vector<8x128xf32>
    %c5 = arith.constant 5 : index
    %c0_23 = arith.constant 0 : index
    %c0_24 = arith.constant 0 : index
    %91 = vector.load %arg2[%c5, %c0_23, %c0_24] : memref<8x8x128xf32, #tpu.memory_space<vmem>>, vector<1x8x128xf32>
    %92 = vector.shape_cast %91 : vector<1x8x128xf32> to vector<8x128xf32>
    %93 = vector.shape_cast %90 : vector<8x128xf32> to vector<1x8x128xf32>
    tpu.vector_store %arg2[%c5, %c0_23, %c0_24], %93 {strides = array<i32>} : memref<8x8x128xf32, #tpu.memory_space<vmem>>, vector<1x8x128xf32>,
    %94 = arith.mulf %86, %39 : vector<8x128xf32>
    %95 = arith.mulf %89, %34 : vector<8x128xf32>
    %96 = arith.addf %94, %95 : vector<8x128xf32>
    %97 = arith.mulf %89, %39 : vector<8x128xf32>
    %98 = arith.mulf %86, %34 : vector<8x128xf32>
    %99 = arith.subf %97, %98 : vector<8x128xf32>
    %100 = arith.mulf %27, %96 : vector<8x128xf32>
    %c6 = arith.constant 6 : index
    %c0_25 = arith.constant 0 : index
    %c0_26 = arith.constant 0 : index
    %101 = vector.load %arg2[%c6, %c0_25, %c0_26] : memref<8x8x128xf32, #tpu.memory_space<vmem>>, vector<1x8x128xf32>
    %102 = vector.shape_cast %101 : vector<1x8x128xf32> to vector<8x128xf32>
    %103 = vector.shape_cast %100 : vector<8x128xf32> to vector<1x8x128xf32>
    tpu.vector_store %arg2[%c6, %c0_25, %c0_26], %103 {strides = array<i32>} : memref<8x8x128xf32, #tpu.memory_space<vmem>>, vector<1x8x128xf32>,
    %104 = arith.mulf %96, %39 : vector<8x128xf32>
    %105 = arith.mulf %99, %34 : vector<8x128xf32>
    %106 = arith.addf %104, %105 : vector<8x128xf32>
    %107 = arith.mulf %27, %106 : vector<8x128xf32>
    %c7 = arith.constant 7 : index
    %c0_27 = arith.constant 0 : index
    %c0_28 = arith.constant 0 : index
    %108 = vector.load %arg2[%c7, %c0_27, %c0_28] : memref<8x8x128xf32, #tpu.memory_space<vmem>>, vector<1x8x128xf32>
    %109 = vector.shape_cast %108 : vector<1x8x128xf32> to vector<8x128xf32>
    %110 = vector.shape_cast %107 : vector<8x128xf32> to vector<1x8x128xf32>
    tpu.vector_store %arg2[%c7, %c0_27, %c0_28], %110 {strides = array<i32>} : memref<8x8x128xf32, #tpu.memory_space<vmem>>, vector<1x8x128xf32>,
    return
  }
  func.func @transform_0(%arg0: i32) -> (i32, i32) {
    %c0_i32 = arith.constant 0 : i32
    %c0_i32_0 = arith.constant 0 : i32
    return %arg0, %c0_i32 : i32, i32
  }
  func.func @transform_1(%arg0: i32) -> (i32, i32, i32) {
    %c0_i32 = arith.constant 0 : i32
    %c0_i32_0 = arith.constant 0 : i32
    %c0_i32_1 = arith.constant 0 : i32
    return %c0_i32, %arg0, %c0_i32_0 : i32, i32, i32
  }
}

</mosaic_0001>

<llo_original>
// kernel: tpu_custom_call.1
$region0: #{tpu_custom_call.1}
  #allocation0 [shape = 'u32[]', space=smem, size = 0x4, offset = 0x4, fixed_abs, tag = 'smem constant byte address 0x4 - core index']
  #allocation1 [shape = 'u32[144,128]{1,0:T(1,128)}', space=vmem, size = 0x12000, scoped, tag = 'internal scratch']
  %s0 = inlined_call_operand.hbm [shape: f32[8,128], index: 0, kind: input, shape index: {}]
  %s1 = inlined_call_operand.hbm [shape: f32[8,8,128], index: 1, kind: output, shape index: {}]
  %s2 = sld [smem:[#allocation0]]
  $region18: #{tpu_custom_call.1} parent=0
    _
  %s4 = ssub.s32 1, %s2
  %s5 = scalar_select 0, %s4, %s2
  $region1: #{tpu_custom_call.1} parent=0
    #allocation2 [shape = 'u8[4096]{0}', space=vmem, size = 0x1000, scoped, tag = 'input window, operand 0, single buffered']
    #allocation3 [shape = 's32[1]{0}', space=sflag, size = 0x4, scoped, tag = 'scoped memory for tpu_custom_call.1']
    #allocation4 [shape = 's32[1]{0}', space=sflag, size = 0x4, scoped, tag = 'scoped memory for tpu_custom_call.1']
    #allocation5 [shape = 'u8[32768]{0}', space=vmem, size = 0x8000, scoped, tag = 'output window, operand 0, single buffered']
    %6 = vsyncpa [#allocation3], 0
    %7 = vsyncpa [#allocation4], 0
    // Predicated region
    $region2: #{tpu_custom_call.1} parent=1 // pred_check
      _
    $region3: #{tpu_custom_call.1} parent=1 // pred_check_branch
      %9 = sbr.rel (0) target = $region5
    $region4: #{tpu_custom_call.1} parent=1 // pred_region
      %s11 = ssub.s32 128, 128
      %12 = vsyncadd [#allocation3], %s11
      %s14 = sshll.u32 [#allocation2], 4
      %s15 = int_to_ptr.vmem [resolvable:$true] %s14
      %17 = dma.hbm_to_vmem [thread:$0]  %s0, 128, %s15, [#allocation3]
    $region5: #{tpu_custom_call.1} parent=1 // pred_fallthru
      _
    // Predicated region
    $region6: #{tpu_custom_call.1} parent=1 // pred_check
      _
    $region7: #{tpu_custom_call.1} parent=1 // pred_check_branch
      %19 = sbr.rel (0) target = $region9
    $region8: #{tpu_custom_call.1} parent=1 // pred_region
      %20 = dma.done [#allocation3], 128
    $region9: #{tpu_custom_call.1} parent=1 // pred_fallthru
      _
    %v21 = vld [vmem:[#allocation2] sm:$0xff]
    %v22 = vmul.f32 %v21, 0.2
    %v23 = vrcp.pop %v22
    %v24 = vmul.f32 %v22, %v23
    %v25 = vsub.f32 2.0, %v24
    %v26 = vmul.f32 %v23, %v25
    %v27 = vmul.f32 %v22, %v26
    %v28 = vsub.f32 2.0, %v27
    %v29 = vmul.f32 %v26, %v28
    %v30 = vmul.f32 %v22, %v22
    %v31 = vmul.f32 %v30, %v30
    %v32 = vmul.f32 %v22, %v31
    %v33 = vmul.f32 %v22, -21.0
    %v34 = vadd.f32 %v33, 48.0
    %v35 = vmul.f32 %v22, %v34
    %v36 = vadd.f32 %v35, -28.0
    %v37 = vmul.f32 %v32, %v36
    %v38 = vadd.f32 %v29, %v37
    %vm39 = vcmp.lt.f32.partialorder %v22, 1.0
    %v40 = vsel %vm39, %v38, 0.0
    %v41 = vmul.f32 %v22, 1.5707964
    %v42 = vand.u32 2147483647, %v41
    %vm43 = vcmp.le.f32.partialorder %v42, 0.7853982
    %vm44 = vcmp.lt.s32.totalorder %v41, 0
    %v45 = vand.u32 %v41, 2139095040
    %v46 = vshrl.u32 %v45, 23
    %v47 = vsub.s32 %v46, 127
    %v48 = vand.u32 2147483647, %v41
    %v49 = vand.u32 %v48, 8388607
    %v50 = vor.u32 %v49, 8388608
    %v51 = vsub.s32 0, %v50
    %v52 = vadd.s32 %v47, 1
    %vm53 = vcmp.gt.s32.totalorder %v52, 0
    %v54 = vsel %vm53, %v52, 0
    %v55 = vshrl.u32 %v54, 5
    %v56 = vand.u32 %v54, 31
    %v57 = vsub.s32 32, %v56
    %v58 = vshrl.u32 683565275, %v57
    %v59 = vshll.u32 683565275, %v56
    %v60 = vshrl.u32 2475754826, %v57
    %v61 = vor.u32 %v59, %v60
    %v62 = vshll.u32 2475754826, %v56
    %v63 = vshrl.u32 2131351028, %v57
    %v64 = vor.u32 %v62, %v63
    %v65 = vshll.u32 2131351028, %v56
    %v66 = vshrl.u32 2102212464, %v57
    %v67 = vor.u32 %v65, %v66
    %v68 = vshll.u32 2102212464, %v56
    %v69 = vshrl.u32 920167782, %v57
    %v70 = vor.u32 %v68, %v69
    %v71 = vshll.u32 920167782, %v56
    %v72 = vshrl.u32 1326507024, %v57
    %v73 = vor.u32 %v71, %v72
    %vm74 = vcmp.lt.s32.totalorder %v55, 1
    %vm75 = vcmp.lt.s32.totalorder %v55, 2
    %vm76 = vcmp.lt.s32.totalorder %v55, 3
    %vm77 = vcmp.lt.s32.totalorder %v55, 4
    %v78 = vsel %vm74, %v58, %v61
    %v79 = vsel %vm77, %v67, 2102212464
    %v80 = vsel %vm76, %v64, %v79
    %v81 = vsel %vm75, %v78, %v80
    %v82 = vsel %vm74, %v61, %v64
    %v83 = vsel %vm77, %v70, 920167782
    %v84 = vsel %vm76, %v67, %v83
    %v85 = vsel %vm75, %v82, %v84
    %v86 = vsel %vm74, %v64, %v67
    %v87 = vsel %vm77, %v73, 1326507024
    %v88 = vsel %vm76, %v70, %v87
    %v89 = vsel %vm75, %v86, %v88
    %v90 = vshll.u32 %v50, 8
    %v91 = vmul.u32.u64.compose %v90, %v89
    %v92 = vextract.low.u32 %v91
    %v93 = vextract.high.u32 %v91
    %v94 = vmul.u32.u64.compose %v90, %v85
    %v95 = vextract.low.u32 %v94
    %v96 = vextract.high.u32 %v94
    %v97 = vmul.u32 %v90, %v81
    %v98 = vadd.s32 %v93, %v95
    %vm99 = vc.u32 %v93, %v95
    %v100 = vadd.s32 %v96, 1
    %v101 = vsel %vm99, %v100, %v96
    %v102 = vadd.s32 %v97, %v101
    %v103 = vadd.s32 %v102, 536870912
    %v104 = vshrl.u32 %v103, 30
    %v105 = vshll.u32 %v104, 30
    %v106 = vsub.s32 %v102, %v105
    %vm107 = vcmp.lt.s32.totalorder %v106, 0
    %v108 = vsub.s32 0, %v106
    %v109 = vsel %vm107, %v108, %v106
    %v110 = vclz %v109
    %v111 = vsub.s32 %v110, 2
    %vm112 = vcmp.gt.s32.totalorder 0, %v111
    %v113 = vsel %vm112, 0, %v111
    %v114 = vsub.s32 32, %v113
    %v115 = vshll.u32 %v106, %v113
    %v116 = vshrl.u32 %v98, %v114
    %v117 = vor.u32 %v115, %v116
    %v118 = vsub.s32 4294967266, %v113
    %v119 = vadd.s32 %v118, 127
    %v120 = vshll.u32 %v119, 23
    %v121 = vor.u32 4788187, %v120
    %v122 = vand.u32 2147483647, %v121
    %v124 = vcvt.s32.f32 %v117
    %v125 = vmul.f32 %v124, %v122
    %v126 = vxor.u32 %v125, 2147483648
    %v127 = vsel %vm44, %v126, %v125
    %v128 = vsub.s32 4, %v104
    %v129 = vsel %vm44, %v128, %v104
    %v130 = vsel %vm43, %v41, %v127
    %v131 = vsel %vm43, 0, %v129
    %v132 = vcosq.f32.pop %v130
    %v133 = vsinq.f32.pop %v130
    %vm134 = vweird.f32 %v41
    %v135 = vadd.s32 %v131, 3
    %v136 = vand.u32 %v135, 3
    %vm137 = vcmp.lt.s32.totalorder %v136, 2
    %vm138 = vcmp.eq.s32.totalorder %v136, 0
    %v139 = vxor.u32 %v133, 2147483648
    %v140 = vsel %vm138, %v132, %v139
    %vm141 = vcmp.eq.s32.totalorder %v136, 2
    %v142 = vxor.u32 %v132, 2147483648
    %v143 = vsel %vm141, %v142, %v133
    %v144 = vsel %vm137, %v140, %v143
    %v145 = vsel %vm134, nan, %v144
    %v146 = vand.u32 2147483647, %v41
    %vm147 = vcmp.le.f32.partialorder %v146, 0.7853982
    %vm148 = vcmp.lt.s32.totalorder %v41, 0
    %v149 = vand.u32 %v41, 2139095040
    %v150 = vshrl.u32 %v149, 23
    %v151 = vsub.s32 %v150, 127
    %v152 = vand.u32 2147483647, %v41
    %v153 = vand.u32 %v152, 8388607
    %v154 = vor.u32 %v153, 8388608
    %v155 = vsub.s32 0, %v154
    %v156 = vadd.s32 %v151, 1
    %vm157 = vcmp.gt.s32.totalorder %v156, 0
    %v158 = vsel %vm157, %v156, 0
    %v159 = vshrl.u32 %v158, 5
    %v160 = vand.u32 %v158, 31
    %v161 = vsub.s32 32, %v160
    %v162 = vshrl.u32 683565275, %v161
    %v163 = vshll.u32 683565275, %v160
    %v164 = vshrl.u32 2475754826, %v161
    %v165 = vor.u32 %v163, %v164
    %v166 = vshll.u32 2475754826, %v160
    %v167 = vshrl.u32 2131351028, %v161
    %v168 = vor.u32 %v166, %v167
    %v169 = vshll.u32 2131351028, %v160
    %v170 = vshrl.u32 2102212464, %v161
    %v171 = vor.u32 %v169, %v170
    %v172 = vshll.u32 2102212464, %v160
    %v173 = vshrl.u32 920167782, %v161
    %v174 = vor.u32 %v172, %v173
    %v175 = vshll.u32 920167782, %v160
    %v176 = vshrl.u32 1326507024, %v161
    %v177 = vor.u32 %v175, %v176
    %vm178 = vcmp.lt.s32.totalorder %v159, 1
    %vm179 = vcmp.lt.s32.totalorder %v159, 2
    %vm180 = vcmp.lt.s32.totalorder %v159, 3
    %vm181 = vcmp.lt.s32.totalorder %v159, 4
    %v182 = vsel %vm178, %v162, %v165
    %v183 = vsel %vm181, %v171, 2102212464
    %v184 = vsel %vm180, %v168, %v183
    %v185 = vsel %vm179, %v182, %v184
    %v186 = vsel %vm178, %v165, %v168
    %v187 = vsel %vm181, %v174, 920167782
    %v188 = vsel %vm180, %v171, %v187
    %v189 = vsel %vm179, %v186, %v188
    %v190 = vsel %vm178, %v168, %v171
    %v191 = vsel %vm181, %v177, 1326507024
    %v192 = vsel %vm180, %v174, %v191
    %v193 = vsel %vm179, %v190, %v192
    %v194 = vshll.u32 %v154, 8
    %v195 = vmul.u32.u64.compose %v194, %v193
    %v196 = vextract.low.u32 %v195
    %v197 = vextract.high.u32 %v195
    %v198 = vmul.u32.u64.compose %v194, %v189
    %v199 = vextract.low.u32 %v198
    %v200 = vextract.high.u32 %v198
    %v201 = vmul.u32 %v194, %v185
    %v202 = vadd.s32 %v197, %v199
    %vm203 = vc.u32 %v197, %v199
    %v204 = vadd.s32 %v200, 1
    %v205 = vsel %vm203, %v204, %v200
    %v206 = vadd.s32 %v201, %v205
    %v207 = vadd.s32 %v206, 536870912
    %v208 = vshrl.u32 %v207, 30
    %v209 = vshll.u32 %v208, 30
    %v210 = vsub.s32 %v206, %v209
    %vm211 = vcmp.lt.s32.totalorder %v210, 0
    %v212 = vsub.s32 0, %v210
    %v213 = vsel %vm211, %v212, %v210
    %v214 = vclz %v213
    %v215 = vsub.s32 %v214, 2
    %vm216 = vcmp.gt.s32.totalorder 0, %v215
    %v217 = vsel %vm216, 0, %v215
    %v218 = vsub.s32 32, %v217
    %v219 = vshll.u32 %v210, %v217
    %v220 = vshrl.u32 %v202, %v218
    %v221 = vor.u32 %v219, %v220
    %v222 = vsub.s32 4294967266, %v217
    %v223 = vadd.s32 %v222, 127
    %v224 = vshll.u32 %v223, 23
    %v225 = vor.u32 4788187, %v224
    %v226 = vand.u32 2147483647, %v225
    %v228 = vcvt.s32.f32 %v221
    %v229 = vmul.f32 %v228, %v226
    %v230 = vxor.u32 %v229, 2147483648
    %v231 = vsel %vm148, %v230, %v229
    %v232 = vsub.s32 4, %v208
    %v233 = vsel %vm148, %v232, %v208
    %v234 = vsel %vm147, %v41, %v231
    %v235 = vsel %vm147, 0, %v233
    %v236 = vcosq.f32.pop %v234
    %v237 = vsinq.f32.pop %v234
    %vm238 = vweird.f32 %v41
    %v239 = vand.u32 %v235, 3
    %vm240 = vcmp.lt.s32.totalorder %v239, 2
    %vm241 = vcmp.eq.s32.totalorder %v239, 0
    %v242 = vxor.u32 %v237, 2147483648
    %v243 = vsel %vm241, %v236, %v242
    %vm244 = vcmp.eq.s32.totalorder %v239, 2
    %v245 = vxor.u32 %v236, 2147483648
    %v246 = vsel %vm244, %v245, %v237
    %v247 = vsel %vm240, %v243, %v246
    %v248 = vsel %vm238, nan, %v247
    %v249 = vmul.f32 %v145, 2.0
    %v250 = vmul.f32 %v249, %v248
    %v251 = vmul.f32 %v249, %v145
    %v252 = vsub.f32 1.0, %v251
    %v253 = vmul.f32 %v40, %v250
    %254 = vst [vmem:[#allocation5] sm:$0xff] %v253
    %v255 = vmul.f32 %v250, %v252
    %v256 = vadd.f32 %v255, %v255
    %v257 = vmul.f32 %v252, %v252
    %v258 = vmul.f32 %v250, %v250
    %v259 = vsub.f32 %v257, %v258
    %v260 = vmul.f32 %v40, %v256
    %s261 = scalar_lea.vmem [#allocation5], 8
    %262 = vst [vmem:[%s261] sm:$0xff] %v260
    %v263 = vmul.f32 %v256, %v252
    %v264 = vmul.f32 %v259, %v250
    %v265 = vadd.f32 %v263, %v264
    %v266 = vmul.f32 %v259, %v252
    %v267 = vmul.f32 %v256, %v250
    %v268 = vsub.f32 %v266, %v267
    %v269 = vmul.f32 %v40, %v265
    %s270 = scalar_lea.vmem [#allocation5], 16
    %271 = vst [vmem:[%s270] sm:$0xff] %v269
    %v272 = vmul.f32 %v265, %v252
    %v273 = vmul.f32 %v268, %v250
    %v274 = vadd.f32 %v272, %v273
    %v275 = vmul.f32 %v268, %v252
    %v276 = vmul.f32 %v265, %v250
    %v277 = vsub.f32 %v275, %v276
    %v278 = vmul.f32 %v40, %v274
    %s279 = scalar_lea.vmem [#allocation5], 24
    %280 = vst [vmem:[%s279] sm:$0xff] %v278
    %v281 = vmul.f32 %v274, %v252
    %v282 = vmul.f32 %v277, %v250
    %v283 = vadd.f32 %v281, %v282
    %v284 = vmul.f32 %v277, %v252
    %v285 = vmul.f32 %v274, %v250
    %v286 = vsub.f32 %v284, %v285
    %v287 = vmul.f32 %v40, %v283
    %s288 = scalar_lea.vmem [#allocation5], 32
    %289 = vst [vmem:[%s288] sm:$0xff] %v287
    %v290 = vmul.f32 %v283, %v252
    %v291 = vmul.f32 %v286, %v250
    %v292 = vadd.f32 %v290, %v291
    %v293 = vmul.f32 %v286, %v252
    %v294 = vmul.f32 %v283, %v250
    %v295 = vsub.f32 %v293, %v294
    %v296 = vmul.f32 %v40, %v292
    %s297 = scalar_lea.vmem [#allocation5], 40
    %298 = vst [vmem:[%s297] sm:$0xff] %v296
    %v299 = vmul.f32 %v292, %v252
    %v300 = vmul.f32 %v295, %v250
    %v301 = vadd.f32 %v299, %v300
    %v302 = vmul.f32 %v295, %v252
    %v303 = vmul.f32 %v292, %v250
    %v304 = vsub.f32 %v302, %v303
    %v305 = vmul.f32 %v40, %v301
    %s306 = scalar_lea.vmem [#allocation5], 48
    %307 = vst [vmem:[%s306] sm:$0xff] %v305
    %v308 = vmul.f32 %v301, %v252
    %v309 = vmul.f32 %v304, %v250
    %v310 = vadd.f32 %v308, %v309
    %v311 = vmul.f32 %v40, %v310
    %s312 = scalar_lea.vmem [#allocation5], 56
    %313 = vst [vmem:[%s312] sm:$0xff] %v311
    // Predicated region
    $region10: #{tpu_custom_call.1} parent=1 // pred_check
      _
    $region11: #{tpu_custom_call.1} parent=1 // pred_check_branch
      %315 = sbr.rel (0) target = $region13
    $region12: #{tpu_custom_call.1} parent=1 // pred_region
      %s317 = ssub.s32 1024, 1024
      %318 = vsyncadd [#allocation4], %s317
      %s319 = sshll.u32 [#allocation5], 4
      %s320 = int_to_ptr.vmem [resolvable:$true] %s319
      %325 = dma.vmem_to_hbm [thread:$0]  %s320, 1024, %s1, [#allocation4], 128, 128, 8
    $region13: #{tpu_custom_call.1} parent=1 // pred_fallthru
      _
    // Predicated region
    $region14: #{tpu_custom_call.1} parent=1 // pred_check
      _
    $region15: #{tpu_custom_call.1} parent=1 // pred_check_branch
      %327 = sbr.rel (0) target = $region17
    $region16: #{tpu_custom_call.1} parent=1 // pred_region
      %328 = dma.done [#allocation4], 1024
    $region17: #{tpu_custom_call.1} parent=1 // pred_fallthru
      _
    %329 = vsyncpa [#allocation3], 1
    %330 = vsyncpa [#allocation4], 1

</llo_original>
